<compile_context>
chip_gen: v7x
topology: tpu7x:2x2x1
jax: 0.10.0
libtpu: 0.0.40
codegen_flags: <defaults>
</compile_context>

<pallas_src>
import jax
import jax.numpy as jnp
from jax.experimental import pallas as pl
from jax.experimental.pallas import tpu as pltpu


def _transition_kernel(x_ref, w_ref, shift_ref, pool_ref, out_ref):
    # x_ref    : (Cin, B*HW)     bf16  B images lane-folded (image-major lanes)
    # w_ref    : (Cout, Cin)     bf16  1x1 conv weight with eval BN scale folded in
    # shift_ref: (Cout, 1)       f32   BN shift (beta - running_mean * scale)
    # pool_ref : (B*HW, B*HpWp)  bf16  block-diagonal 2x2 avg-pool matrix (0.25 taps)
    # out_ref  : (Cout, B*HpWp)  f32   lane-dense pooled slab for the B images
    y = jnp.dot(w_ref[...], x_ref[...],
                preferred_element_type=jnp.float32)            # (Cout, B*HW), f32 acc
    y = jnp.maximum(y + shift_ref[...], 0.0)                   # BN shift + ReLU in f32
    pooled = jnp.dot(y.astype(jnp.bfloat16), pool_ref[...],
                     preferred_element_type=jnp.float32)       # (Cout, B*HpWp)
    out_ref[...] = pooled.astype(out_ref.dtype)


def _images_per_step(n, hpwp, lane_target=128):
    """Smallest B (dividing n) such that the pooled slab B*hpwp is lane-dense.

    If hpwp >= 128 this returns 1, keeping grid=(n,) so dimension_semantics
    ("parallel",) can still shard steps across both v7x TensorCores."""
    b = min(n, max(1, -(-lane_target // hpwp)))   # ceil(lane_target / hpwp), capped at n
    while n % b:
        b -= 1
    return b


def transition_forward(x_nchw, weight_oihw, gamma, beta, running_mean, running_var,
                       *, eps=1e-5):
    """x_nchw: (N, Cin, H, W) f32; weight_oihw: (Cout, Cin, 1, 1) f32.
    Returns (N, Cout, H//2, W//2), matching
    avg_pool2d(relu(bn(conv1x1(x))), 2, ceil_mode=True) in eval mode."""
    N, Cin, H, W = x_nchw.shape
    Cout = weight_oihw.shape[0]
    assert H % 2 == 0 and W % 2 == 0, "even spatial dims only (ceil_mode is a no-op)"
    Hp, Wp = H // 2, W // 2
    HW, HpWp = H * W, Hp * Wp

    B = _images_per_step(N, HpWp)     # images per grid step
    steps = N // B

    # ---- glue: fold eval-mode BN (affine with running stats) into the 1x1 conv ----
    scale = gamma * jax.lax.rsqrt(running_var + eps)                    # (Cout,)
    shift = beta - running_mean * scale                                 # (Cout,)
    w2d = (weight_oihw.reshape(Cout, Cin) * scale[:, None]).astype(jnp.bfloat16)
    shift2d = shift.reshape(Cout, 1).astype(jnp.float32)

    # ---- block-diagonal 2x2/stride-2 avg-pool matrix for B lane-folded images ----
    idx = jnp.arange(B * HW)
    b_img, hw = idx // HW, idx % HW
    h, w = hw // W, hw % W
    col = b_img * HpWp + (h // 2) * Wp + (w // 2)
    pool_mat = jnp.where(col[:, None] == jnp.arange(B * HpWp)[None, :],
                         0.25, 0.0).astype(jnp.bfloat16)    # 0.25 exact in bf16

    # ---- lane-fold the batch: (N, Cin, H, W) -> (Cin, N*HW), image-major lanes ----
    x2d = (x_nchw.reshape(N, Cin, HW)
           .transpose(1, 0, 2)
           .reshape(Cin, N * HW)
           .astype(jnp.bfloat16))

    flops = 2 * Cout * Cin * N * HW + 2 * Cout * (B * HW) * (B * HpWp) * steps
    bytes_accessed = (x2d.size * 2 + w2d.size * 2 + shift2d.size * 4
                      + pool_mat.size * 2 + Cout * N * HpWp * 4)

    out2d = pl.pallas_call(
        _transition_kernel,
        out_shape=jax.ShapeDtypeStruct((Cout, N * HpWp), jnp.float32),
        grid_spec=pltpu.PrefetchScalarGridSpec(
            num_scalar_prefetch=0,
            grid=(steps,),
            in_specs=[
                pl.BlockSpec((Cin, B * HW), lambda i: (0, i)),
                pl.BlockSpec((Cout, Cin), lambda i: (0, 0)),
                pl.BlockSpec((Cout, 1), lambda i: (0, 0)),
                pl.BlockSpec((B * HW, B * HpWp), lambda i: (0, 0)),
            ],
            out_specs=pl.BlockSpec((Cout, B * HpWp), lambda i: (0, i)),
        ),
        compiler_params=pltpu.CompilerParams(
            dimension_semantics=("parallel",)),
        cost_estimate=pl.CostEstimate(
            flops=int(flops), transcendentals=0, bytes_accessed=int(bytes_accessed)),
    )(x2d, w2d, shift2d, pool_mat)

    # TODO(synk): training-mode Dropout(p=0.2); eval-mode dropout is identity.
    # (Cout, N*HpWp) -> (N, Cout, Hp, Wp): cheap one-shot relayout in the wrapper.
    return out2d.reshape(Cout, N, Hp, Wp).transpose(1, 0, 2, 3)


def _reference(x, weight_oihw, gamma, beta, mean, var, eps=1e-5):
    """Pure-JAX f32 reference of the same PyTorch forward (eval mode)."""
    y = jax.lax.conv_general_dilated(
        x, weight_oihw, window_strides=(1, 1), padding="VALID",
        dimension_numbers=("NCHW", "OIHW", "NCHW"))
    y = (y - mean[None, :, None, None]) * jax.lax.rsqrt(var[None, :, None, None] + eps)
    y = y * gamma[None, :, None, None] + beta[None, :, None, None]
    y = jnp.maximum(y, 0.0)
    n, c, hh, ww = y.shape
    return y.reshape(n, c, hh // 2, 2, ww // 2, 2).mean(axis=(3, 5))


if __name__ == "__main__":
    # Module config: nChannels=4, nOutChannels=8, use_dropout=False
    N, Cin, H, W = 2, 4, 16, 16
    Cout = 8

    key = jax.random.PRNGKey(0)
    kx, kw, kg, kb, km, kv = jax.random.split(key, 6)
    x = jax.random.normal(kx, (N, Cin, H, W), dtype=jnp.float32)
    # Kaiming-like init for the 1x1 conv weight (bias=False in the module)
    fan_in = Cin * 1 * 1
    weight = jax.random.normal(kw, (Cout, Cin, 1, 1), dtype=jnp.float32) * (2.0 / fan_in) ** 0.5
    # eval-mode BatchNorm parameters / running statistics
    gamma = jax.random.uniform(kg, (Cout,), minval=0.5, maxval=1.5, dtype=jnp.float32)
    beta = jax.random.normal(kb, (Cout,), dtype=jnp.float32) * 0.1
    running_mean = jax.random.normal(km, (Cout,), dtype=jnp.float32) * 0.1
    running_var = jax.random.uniform(kv, (Cout,), minval=0.5, maxval=1.5, dtype=jnp.float32)

    y = transition_forward(x, weight, gamma, beta, running_mean, running_var)
    y = jax.block_until_ready(y)

    y_ref = _reference(x, weight, gamma, beta, running_mean, running_var)
    assert y.shape == (N, Cout, H // 2, W // 2)
    # Tolerance loosened vs. the pure-f32 version: the matmuls now run on the
    # native bf16 MXU path (expected ~1e-3 relative error).
    assert jnp.allclose(y, y_ref, atol=2e-2, rtol=2e-2), float(jnp.max(jnp.abs(y - y_ref)))

    print("KERNEL_OK")
</pallas_src>

<mosaic_0001>
module attributes {stable_mosaic.version = 11 : i64} {
  func.func @_transition_kernel(%arg0: i32, %arg1: memref<4x512xbf16, #tpu.memory_space<vmem>>, %arg2: memref<8x4xbf16, #tpu.memory_space<vmem>>, %arg3: memref<8x1xf32, #tpu.memory_space<vmem>>, %arg4: memref<512x128xbf16, #tpu.memory_space<vmem>>, %arg5: memref<8x128xf32, #tpu.memory_space<vmem>>) attributes {dimension_semantics = [#tpu.dimension_semantics<parallel>], iteration_bounds = array<i64: 1>, scalar_prefetch = 0 : i64, scratch_operands = 0 : i64, tpu.core_type = #tpu.core_type<tc>, window_params = [{transform_indices = @transform_0, window_bounds = array<i64: 4, 512>}, {pipeline_mode = #tpu.pipeline_mode<synchronous>, transform_indices = @transform_1, window_bounds = array<i64: 8, 4>}, {pipeline_mode = #tpu.pipeline_mode<synchronous>, transform_indices = @transform_2, window_bounds = array<i64: 8, 1>}, {pipeline_mode = #tpu.pipeline_mode<synchronous>, transform_indices = @transform_3, window_bounds = array<i64: 512, 128>}, {transform_indices = @transform_4, window_bounds = array<i64: 8, 128>}]} {
    %c0 = arith.constant 0 : index
    %c0_0 = arith.constant 0 : index
    %0 = vector.load %arg2[%c0, %c0_0] : memref<8x4xbf16, #tpu.memory_space<vmem>>, vector<8x4xbf16>
    %c0_1 = arith.constant 0 : index
    %c0_2 = arith.constant 0 : index
    %1 = vector.load %arg1[%c0_1, %c0_2] : memref<4x512xbf16, #tpu.memory_space<vmem>>, vector<4x512xbf16>
    %cst = arith.constant dense<0.000000e+00> : vector<8x512xf32>
    %2 = tpu.matmul %0, %1, %cst {dimension_numbers = #tpu.dot_dimension_numbers<[1], [0], [0], [1], [0, 0, 1, 1], [], []>} : vector<8x4xbf16>, vector<4x512xbf16>, vector<8x512xf32> -> vector<8x512xf32>
    %c0_3 = arith.constant 0 : index
    %c0_4 = arith.constant 0 : index
    %3 = vector.load %arg3[%c0_3, %c0_4] : memref<8x1xf32, #tpu.memory_space<vmem>>, vector<8x1xf32>
    %4 = vector.broadcast %3 : vector<8x1xf32> to vector<8x512xf32>
    %5 = arith.addf %2, %4 : vector<8x512xf32>
    %cst_5 = arith.constant 0.000000e+00 : f32
    %6 = vector.broadcast %cst_5 : f32 to vector<8x512xf32>
    %7 = arith.maximumf %5, %6 : vector<8x512xf32>
    %8 = arith.truncf %7 : vector<8x512xf32> to vector<8x512xbf16>
    %c0_6 = arith.constant 0 : index
    %c0_7 = arith.constant 0 : index
    %9 = vector.load %arg4[%c0_6, %c0_7] : memref<512x128xbf16, #tpu.memory_space<vmem>>, vector<512x128xbf16>
    %cst_8 = arith.constant dense<0.000000e+00> : vector<8x128xf32>
    %10 = tpu.matmul %8, %9, %cst_8 {dimension_numbers = #tpu.dot_dimension_numbers<[1], [0], [0], [1], [0, 0, 1, 1], [], []>} : vector<8x512xbf16>, vector<512x128xbf16>, vector<8x128xf32> -> vector<8x128xf32>
    %c0_9 = arith.constant 0 : index
    %c0_10 = arith.constant 0 : index
    %11 = vector.load %arg5[%c0_9, %c0_10] : memref<8x128xf32, #tpu.memory_space<vmem>>, vector<8x128xf32>
    tpu.vector_store %arg5[%c0_9, %c0_10], %10 {strides = array<i32>} : memref<8x128xf32, #tpu.memory_space<vmem>>, vector<8x128xf32>,
    return
  }
  func.func @transform_0(%arg0: i32) -> (i32, i32) {
    %c0_i32 = arith.constant 0 : i32
    %c0_i32_0 = arith.constant 0 : i32
    return %c0_i32, %arg0 : i32, i32
  }
  func.func @transform_1(%arg0: i32) -> (i32, i32) {
    %c0_i32 = arith.constant 0 : i32
    %c0_i32_0 = arith.constant 0 : i32
    %c0_i32_1 = arith.constant 0 : i32
    return %c0_i32, %c0_i32_0 : i32, i32
  }
  func.func @transform_2(%arg0: i32) -> (i32, i32) {
    %c0_i32 = arith.constant 0 : i32
    %c0_i32_0 = arith.constant 0 : i32
    %c0_i32_1 = arith.constant 0 : i32
    return %c0_i32, %c0_i32_0 : i32, i32
  }
  func.func @transform_3(%arg0: i32) -> (i32, i32) {
    %c0_i32 = arith.constant 0 : i32
    %c0_i32_0 = arith.constant 0 : i32
    %c0_i32_1 = arith.constant 0 : i32
    return %c0_i32, %c0_i32_0 : i32, i32
  }
  func.func @transform_4(%arg0: i32) -> (i32, i32) {
    %c0_i32 = arith.constant 0 : i32
    %c0_i32_0 = arith.constant 0 : i32
    return %c0_i32, %arg0 : i32, i32
  }
}

</mosaic_0001>

<llo_original>
// kernel: tpu_custom_call.1
$region0: #{tpu_custom_call.1}
  #allocation0 [shape = 'u32[]', space=smem, size = 0x4, offset = 0x4, fixed_abs, tag = 'smem constant byte address 0x4 - core index']
  #allocation1 [shape = 'u32[144,128]{1,0:T(1,128)}', space=vmem, size = 0x12000, scoped, tag = 'internal scratch']
  %s0 = inlined_call_operand.vmem [shape: bf16[4,512], index: 0, kind: input, shape index: {}]
  %s1 = inlined_call_operand.vmem [shape: bf16[8,4], index: 1, kind: input, shape index: {}]
  %s2 = inlined_call_operand.vmem [shape: f32[8,1], index: 2, kind: input, shape index: {}]
  %s3 = inlined_call_operand.hbm [shape: bf16[512,128], index: 3, kind: input, shape index: {}]
  %s4 = inlined_call_operand.hbm [shape: f32[8,128], index: 4, kind: output, shape index: {}]
  %s5 = sld [smem:[#allocation0]]
  $region30: #{tpu_custom_call.1} parent=0
    _
  %s7 = ssub.s32 1, %s5
  %s8 = scalar_select 0, %s7, %s5
  $region1: #{tpu_custom_call.1} parent=0
    #allocation2 [shape = 'u8[131072]{0}', space=vmem, size = 0x20000, scoped, tag = 'input window, operand 3, single buffered']
    #allocation3 [shape = 's32[1]{0}', space=sflag, size = 0x4, scoped, tag = 'scoped memory for tpu_custom_call.1']
    #allocation4 [shape = 's32[1]{0}', space=sflag, size = 0x4, scoped, tag = 'scoped memory for tpu_custom_call.1']
    #allocation5 [shape = 'u8[4096]{0}', space=vmem, size = 0x1000, scoped, tag = 'output window, operand 0, single buffered']
    %9 = vsyncpa [#allocation3], 0
    %10 = vsyncpa [#allocation4], 0
    // Predicated region
    $region2: #{tpu_custom_call.1} parent=1 // pred_check
      _
    $region3: #{tpu_custom_call.1} parent=1 // pred_check_branch
      %12 = sbr.rel (0) target = $region5
    $region4: #{tpu_custom_call.1} parent=1 // pred_region
      _
    $region5: #{tpu_custom_call.1} parent=1 // pred_fallthru
      _
    // Predicated region
    $region6: #{tpu_custom_call.1} parent=1 // pred_check
      _
    $region7: #{tpu_custom_call.1} parent=1 // pred_check_branch
      %14 = sbr.rel (0) target = $region9
    $region8: #{tpu_custom_call.1} parent=1 // pred_region
      _
    $region9: #{tpu_custom_call.1} parent=1 // pred_fallthru
      _
    // Predicated region
    $region10: #{tpu_custom_call.1} parent=1 // pred_check
      _
    $region11: #{tpu_custom_call.1} parent=1 // pred_check_branch
      %16 = sbr.rel (0) target = $region13
    $region12: #{tpu_custom_call.1} parent=1 // pred_region
      _
    $region13: #{tpu_custom_call.1} parent=1 // pred_fallthru
      _
    // Predicated region
    $region14: #{tpu_custom_call.1} parent=1 // pred_check
      _
    $region15: #{tpu_custom_call.1} parent=1 // pred_check_branch
      %18 = sbr.rel (0) target = $region17
    $region16: #{tpu_custom_call.1} parent=1 // pred_region
      %s20 = ssub.s32 4096, 4096
      %21 = vsyncadd [#allocation3], %s20
      %s22 = sshll.u32 [#allocation2], 4
      %s23 = int_to_ptr.vmem [resolvable:$true] %s22
      %28 = dma.hbm_to_vmem [thread:$0]  %s3, 4096, %s23, [#allocation3], 64, 64, 4
    $region17: #{tpu_custom_call.1} parent=1 // pred_fallthru
      _
    // Predicated region
    $region18: #{tpu_custom_call.1} parent=1 // pred_check
      _
    $region19: #{tpu_custom_call.1} parent=1 // pred_check_branch
      %30 = sbr.rel (0) target = $region21
    $region20: #{tpu_custom_call.1} parent=1 // pred_region
      %31 = dma.done [#allocation3], 4096
    $region21: #{tpu_custom_call.1} parent=1 // pred_fallthru
      _
    %v33 = vld [vmem:[%s1] sm:$0xf]
    %v34 = vld [vmem:[%s0] sm:$0xff]
    %v35 = vld [vmem:[%s2] sm:$0xff]
    %37 = vset.pattern.permute.xlu0 0
    %38 = vperm.xlu0 %37, %v35
    %v39 = vpop.permute.xlu0 %38
    %v42 = vcombine.high %v34, %v34
    %v44 = vunpack.c.l.s4 1983009808
    %v45 = vunpack.c.0.s8 %v44
    %v46 = vlaneseq
    %v47 = vshrl.u32 %v46, 7
    %v48 = vsub.s32 %v45, %v47
    %v49 = vrot.slane %v34, %v48
    %v51 = vunpack.c.l.s4 1983009808
    %v52 = vunpack.c.0.s8 %v51
    %v53 = vlaneseq
    %v54 = vshrl.u32 %v53, 7
    %v55 = vsub.s32 %v52, %v54
    %v56 = vrot.slane %v42, %v55
    %v57 = vcombine.high %v49, %v49
    %v58 = vcombine.high %v56, %v56
    %vm59 = vcmask 31744
    %v61 = vsel %vm59, %v33, 0
    %vm63 = vcmask 1041408
    %v65 = vsel %vm63, %v49, 0
    %v68 = vsel %vm63, %v57, 0
    %v71 = vsel %vm63, %v56, 0
    %v74 = vsel %vm63, %v58, 0
    %76 = vmatprep.subr.bf16.mxu0 %v68
    %77 = vmatpush1.bf16.msra.mxu0 %v65
    %78 = vmatprep.subr.bf16.mxu0 0
    %79 = vmatpush1.bf16.msra.mxu0 0
    %80 = vmatprep.subr.bf16.mxu0 0
    %81 = vmatpush1.bf16.msra.mxu0 0
    %82 = vmatprep.subr.bf16.mxu0 0
    %83 = vmatpush1.bf16.msra.mxu0 0
    %84 = vmatprep.subr.bf16.mxu0 0
    %85 = vmatpush1.bf16.msra.mxu0 0
    %86 = vmatprep.subr.bf16.mxu0 0
    %87 = vmatpush1.bf16.msra.mxu0 0
    %88 = vmatprep.subr.bf16.mxu0 0
    %89 = vmatpush1.bf16.msra.mxu0 0
    %90 = vmatprep.subr.bf16.mxu0 0
    %91 = vmatpush1.bf16.msra.mxu0 0
    %92 = vmatprep.subr.bf16.mxu0 0
    %93 = vmatpush1.bf16.msra.mxu0 0
    %94 = vmatprep.subr.bf16.mxu0 0
    %95 = vmatpush1.bf16.msra.mxu0 0
    %96 = vmatprep.subr.bf16.mxu0 0
    %97 = vmatpush1.bf16.msra.mxu0 0
    %98 = vmatprep.subr.bf16.mxu0 0
    %99 = vmatpush1.bf16.msra.mxu0 0
    %100 = vmatprep.subr.bf16.mxu0 0
    %101 = vmatpush1.bf16.msra.mxu0 0
    %102 = vmatprep.subr.bf16.mxu0 0
    %103 = vmatpush1.bf16.msra.mxu0 0
    %104 = vmatprep.subr.bf16.mxu0 0
    %105 = vmatpush1.bf16.msra.mxu0 0
    %106 = vmatprep.subr.bf16.mxu0 0
    %107 = vmatpush1.bf16.msra.mxu0 0
    %108 = vmatprep.mubr.bf16.mxu0 0
    %109 = vmatmul.mubr.bf16.gmra.mrb[0].mxu0 %v61
    %v110 = vpop.f32.mrb[0].mxu0
    %v111 = vadd.f32 %v39, %v110
    %v112 = vpop.f32.mrb[0].mxu0
    %v113 = vadd.f32 %v39, %v112
    %v114 = vpop.f32.mrb[0].mxu0
    %v115 = vpop.f32.mrb[0].mxu0
    %116 = vdwg.mxu0
    %117 = vmatprep.subr.bf16.mxu0 %v74
    %118 = vmatpush1.bf16.msra.mxu0 %v71
    %119 = vmatprep.subr.bf16.mxu0 0
    %120 = vmatpush1.bf16.msra.mxu0 0
    %121 = vmatprep.subr.bf16.mxu0 0
    %122 = vmatpush1.bf16.msra.mxu0 0
    %123 = vmatprep.subr.bf16.mxu0 0
    %124 = vmatpush1.bf16.msra.mxu0 0
    %125 = vmatprep.subr.bf16.mxu0 0
    %126 = vmatpush1.bf16.msra.mxu0 0
    %127 = vmatprep.subr.bf16.mxu0 0
    %128 = vmatpush1.bf16.msra.mxu0 0
    %129 = vmatprep.subr.bf16.mxu0 0
    %130 = vmatpush1.bf16.msra.mxu0 0
    %131 = vmatprep.subr.bf16.mxu0 0
    %132 = vmatpush1.bf16.msra.mxu0 0
    %133 = vmatprep.subr.bf16.mxu0 0
    %134 = vmatpush1.bf16.msra.mxu0 0
    %135 = vmatprep.subr.bf16.mxu0 0
    %136 = vmatpush1.bf16.msra.mxu0 0
    %137 = vmatprep.subr.bf16.mxu0 0
    %138 = vmatpush1.bf16.msra.mxu0 0
    %139 = vmatprep.subr.bf16.mxu0 0
    %140 = vmatpush1.bf16.msra.mxu0 0
    %141 = vmatprep.subr.bf16.mxu0 0
    %142 = vmatpush1.bf16.msra.mxu0 0
    %143 = vmatprep.subr.bf16.mxu0 0
    %144 = vmatpush1.bf16.msra.mxu0 0
    %145 = vmatprep.subr.bf16.mxu0 0
    %146 = vmatpush1.bf16.msra.mxu0 0
    %147 = vmatprep.subr.bf16.mxu0 0
    %148 = vmatpush1.bf16.msra.mxu0 0
    %149 = vmatprep.mubr.bf16.mxu0 0
    %150 = vmatmul.mubr.bf16.gmra.mrb[0].mxu0 %v61
    %v151 = vpop.f32.mrb[0].mxu0
    %v152 = vadd.f32 %v39, %v151
    %v153 = vpop.f32.mrb[0].mxu0
    %v154 = vadd.f32 %v39, %v153
    %v155 = vpop.f32.mrb[0].mxu0
    %v156 = vpop.f32.mrb[0].mxu0
    %157 = vdwg.mxu0
    %v158 = vmax.f32 %v111, 0.0
    %v159 = vmax.f32 %v113, 0.0
    %v160 = vmax.f32 %v152, 0.0
    %v161 = vmax.f32 %v154, 0.0
    %v162 = vpack.c.bf16 %v158, %v158
    %v163 = vpack.c.bf16 %v159, %v159
    %v164 = vpack.c.bf16 %v160, %v160
    %v165 = vpack.c.bf16 %v161, %v161
    %v166 = vld [vmem:[#allocation2] sm:$0xf]
    %v167 = vld [vmem:[#allocation2 + $0x4] sm:$0xf]
    %v168 = vld [vmem:[#allocation2 + $0x8] sm:$0xf]
    %v169 = vld [vmem:[#allocation2 + $0xc] sm:$0xf]
    %v170 = vld [vmem:[#allocation2 + $0x10] sm:$0xf]
    %v171 = vld [vmem:[#allocation2 + $0x14] sm:$0xf]
    %v172 = vld [vmem:[#allocation2 + $0x18] sm:$0xf]
    %v173 = vld [vmem:[#allocation2 + $0x1c] sm:$0xf]
    %v174 = vld [vmem:[#allocation2 + $0x20] sm:$0xf]
    %v175 = vld [vmem:[#allocation2 + $0x24] sm:$0xf]
    %v176 = vld [vmem:[#allocation2 + $0x28] sm:$0xf]
    %v177 = vld [vmem:[#allocation2 + $0x2c] sm:$0xf]
    %v178 = vld [vmem:[#allocation2 + $0x30] sm:$0xf]
    %v179 = vld [vmem:[#allocation2 + $0x34] sm:$0xf]
    %v180 = vld [vmem:[#allocation2 + $0x38] sm:$0xf]
    %v181 = vld [vmem:[#allocation2 + $0x3c] sm:$0xf]
    %v182 = vld [vmem:[#allocation2 + $0x40] sm:$0xf]
    %v183 = vld [vmem:[#allocation2 + $0x44] sm:$0xf]
    %v184 = vld [vmem:[#allocation2 + $0x48] sm:$0xf]
    %v185 = vld [vmem:[#allocation2 + $0x4c] sm:$0xf]
    %v186 = vld [vmem:[#allocation2 + $0x50] sm:$0xf]
    %v187 = vld [vmem:[#allocation2 + $0x54] sm:$0xf]
    %v188 = vld [vmem:[#allocation2 + $0x58] sm:$0xf]
    %v189 = vld [vmem:[#allocation2 + $0x5c] sm:$0xf]
    %v190 = vld [vmem:[#allocation2 + $0x60] sm:$0xf]
    %v191 = vld [vmem:[#allocation2 + $0x64] sm:$0xf]
    %v192 = vld [vmem:[#allocation2 + $0x68] sm:$0xf]
    %v193 = vld [vmem:[#allocation2 + $0x6c] sm:$0xf]
    %v194 = vld [vmem:[#allocation2 + $0x70] sm:$0xf]
    %v195 = vld [vmem:[#allocation2 + $0x74] sm:$0xf]
    %v196 = vld [vmem:[#allocation2 + $0x78] sm:$0xf]
    %v197 = vld [vmem:[#allocation2 + $0x7c] sm:$0xf]
    %v198 = vld [vmem:[#allocation2 + $0x80] sm:$0xf]
    %v199 = vld [vmem:[#allocation2 + $0x84] sm:$0xf]
    %v200 = vld [vmem:[#allocation2 + $0x88] sm:$0xf]
    %v201 = vld [vmem:[#allocation2 + $0x8c] sm:$0xf]
    %v202 = vld [vmem:[#allocation2 + $0x90] sm:$0xf]
    %v203 = vld [vmem:[#allocation2 + $0x94] sm:$0xf]
    %v204 = vld [vmem:[#allocation2 + $0x98] sm:$0xf]
    %v205 = vld [vmem:[#allocation2 + $0x9c] sm:$0xf]
    %v206 = vld [vmem:[#allocation2 + $0xa0] sm:$0xf]
    %v207 = vld [vmem:[#allocation2 + $0xa4] sm:$0xf]
    %v208 = vld [vmem:[#allocation2 + $0xa8] sm:$0xf]
    %v209 = vld [vmem:[#allocation2 + $0xac] sm:$0xf]
    %v210 = vld [vmem:[#allocation2 + $0xb0] sm:$0xf]
    %v211 = vld [vmem:[#allocation2 + $0xb4] sm:$0xf]
    %v212 = vld [vmem:[#allocation2 + $0xb8] sm:$0xf]
    %v213 = vld [vmem:[#allocation2 + $0xbc] sm:$0xf]
    %v214 = vld [vmem:[#allocation2 + $0xc0] sm:$0xf]
    %v215 = vld [vmem:[#allocation2 + $0xc4] sm:$0xf]
    %v216 = vld [vmem:[#allocation2 + $0xc8] sm:$0xf]
    %v217 = vld [vmem:[#allocation2 + $0xcc] sm:$0xf]
    %v218 = vld [vmem:[#allocation2 + $0xd0] sm:$0xf]
    %v219 = vld [vmem:[#allocation2 + $0xd4] sm:$0xf]
    %v220 = vld [vmem:[#allocation2 + $0xd8] sm:$0xf]
    %v221 = vld [vmem:[#allocation2 + $0xdc] sm:$0xf]
    %v222 = vld [vmem:[#allocation2 + $0xe0] sm:$0xf]
    %v223 = vld [vmem:[#allocation2 + $0xe4] sm:$0xf]
    %v224 = vld [vmem:[#allocation2 + $0xe8] sm:$0xf]
    %v225 = vld [vmem:[#allocation2 + $0xec] sm:$0xf]
    %v226 = vld [vmem:[#allocation2 + $0xf0] sm:$0xf]
    %v227 = vld [vmem:[#allocation2 + $0xf4] sm:$0xf]
    %v228 = vld [vmem:[#allocation2 + $0xf8] sm:$0xf]
    %v229 = vld [vmem:[#allocation2 + $0xfc] sm:$0xf]
    %v294 = vunpack.c.l.b16 %v166
    %v295 = vunpack.c.l.b16 %v167
    %v296 = vunpack.c.l.b16 %v168
    %v297 = vunpack.c.l.b16 %v169
    %v298 = vunpack.c.l.b16 %v170
    %v299 = vunpack.c.l.b16 %v171
    %v300 = vunpack.c.l.b16 %v172
    %v301 = vunpack.c.l.b16 %v173
    %v302 = vunpack.c.l.b16 %v174
    %v303 = vunpack.c.l.b16 %v175
    %v304 = vunpack.c.l.b16 %v176
    %v305 = vunpack.c.l.b16 %v177
    %v306 = vunpack.c.l.b16 %v178
    %v307 = vunpack.c.l.b16 %v179
    %v308 = vunpack.c.l.b16 %v180
    %v309 = vunpack.c.l.b16 %v181
    %v310 = vunpack.c.l.b16 %v182
    %v311 = vunpack.c.l.b16 %v183
    %v312 = vunpack.c.l.b16 %v184
    %v313 = vunpack.c.l.b16 %v185
    %v314 = vunpack.c.l.b16 %v186
    %v315 = vunpack.c.l.b16 %v187
    %v316 = vunpack.c.l.b16 %v188
    %v317 = vunpack.c.l.b16 %v189
    %v318 = vunpack.c.l.b16 %v190
    %v319 = vunpack.c.l.b16 %v191
    %v320 = vunpack.c.l.b16 %v192
    %v321 = vunpack.c.l.b16 %v193
    %v322 = vunpack.c.l.b16 %v194
    %v323 = vunpack.c.l.b16 %v195
    %v324 = vunpack.c.l.b16 %v196
    %v325 = vunpack.c.l.b16 %v197
    %v326 = vunpack.c.l.b16 %v198
    %v327 = vunpack.c.l.b16 %v199
    %v328 = vunpack.c.l.b16 %v200
    %v329 = vunpack.c.l.b16 %v201
    %v330 = vunpack.c.l.b16 %v202
    %v331 = vunpack.c.l.b16 %v203
    %v332 = vunpack.c.l.b16 %v204
    %v333 = vunpack.c.l.b16 %v205
    %v334 = vunpack.c.l.b16 %v206
    %v335 = vunpack.c.l.b16 %v207
    %v336 = vunpack.c.l.b16 %v208
    %v337 = vunpack.c.l.b16 %v209
    %v338 = vunpack.c.l.b16 %v210
    %v339 = vunpack.c.l.b16 %v211
    %v340 = vunpack.c.l.b16 %v212
    %v341 = vunpack.c.l.b16 %v213
    %v342 = vunpack.c.l.b16 %v214
    %v343 = vunpack.c.l.b16 %v215
    %v344 = vunpack.c.l.b16 %v216
    %v345 = vunpack.c.l.b16 %v217
    %v346 = vunpack.c.l.b16 %v218
    %v347 = vunpack.c.l.b16 %v219
    %v348 = vunpack.c.l.b16 %v220
    %v349 = vunpack.c.l.b16 %v221
    %v350 = vunpack.c.l.b16 %v222
    %v351 = vunpack.c.l.b16 %v223
    %v352 = vunpack.c.l.b16 %v224
    %v353 = vunpack.c.l.b16 %v225
    %v354 = vunpack.c.l.b16 %v226
    %v355 = vunpack.c.l.b16 %v227
    %v356 = vunpack.c.l.b16 %v228
    %v357 = vunpack.c.l.b16 %v229
    %v358 = vpack.c.b16 %v295, %v294
    %v359 = vpack.c.b16 %v297, %v296
    %v360 = vpack.c.b16 %v299, %v298
    %v361 = vpack.c.b16 %v301, %v300
    %v362 = vpack.c.b16 %v303, %v302
    %v363 = vpack.c.b16 %v305, %v304
    %v364 = vpack.c.b16 %v307, %v306
    %v365 = vpack.c.b16 %v309, %v308
    %v366 = vpack.c.b16 %v311, %v310
    %v367 = vpack.c.b16 %v313, %v312
    %v368 = vpack.c.b16 %v315, %v314
    %v369 = vpack.c.b16 %v317, %v316
    %v370 = vpack.c.b16 %v319, %v318
    %v371 = vpack.c.b16 %v321, %v320
    %v372 = vpack.c.b16 %v323, %v322
    %v373 = vpack.c.b16 %v325, %v324
    %v374 = vpack.c.b16 %v327, %v326
    %v375 = vpack.c.b16 %v329, %v328
    %v376 = vpack.c.b16 %v331, %v330
    %v377 = vpack.c.b16 %v333, %v332
    %v378 = vpack.c.b16 %v335, %v334
    %v379 = vpack.c.b16 %v337, %v336
    %v380 = vpack.c.b16 %v339, %v338
    %v381 = vpack.c.b16 %v341, %v340
    %v382 = vpack.c.b16 %v343, %v342
    %v383 = vpack.c.b16 %v345, %v344
    %v384 = vpack.c.b16 %v347, %v346
    %v385 = vpack.c.b16 %v349, %v348
    %v386 = vpack.c.b16 %v351, %v350
    %v387 = vpack.c.b16 %v353, %v352
    %v388 = vpack.c.b16 %v355, %v354
    %v389 = vpack.c.b16 %v357, %v356
    %422 = vmatprep.subr.bf16.mxu0 0
    %423 = vmatpush1.bf16.msra.mxu0 %v358
    %424 = vmatprep.subr.bf16.mxu0 0
    %425 = vmatpush1.bf16.msra.mxu0 %v359
    %426 = vmatprep.subr.bf16.mxu0 0
    %427 = vmatpush1.bf16.msra.mxu0 %v360
    %428 = vmatprep.subr.bf16.mxu0 0
    %429 = vmatpush1.bf16.msra.mxu0 %v361
    %430 = vmatprep.subr.bf16.mxu0 0
    %431 = vmatpush1.bf16.msra.mxu0 %v362
    %432 = vmatprep.subr.bf16.mxu0 0
    %433 = vmatpush1.bf16.msra.mxu0 %v363
    %434 = vmatprep.subr.bf16.mxu0 0
    %435 = vmatpush1.bf16.msra.mxu0 %v364
    %436 = vmatprep.subr.bf16.mxu0 0
    %437 = vmatpush1.bf16.msra.mxu0 %v365
    %438 = vmatprep.subr.bf16.mxu0 0
    %439 = vmatpush1.bf16.msra.mxu0 %v366
    %440 = vmatprep.subr.bf16.mxu0 0
    %441 = vmatpush1.bf16.msra.mxu0 %v367
    %442 = vmatprep.subr.bf16.mxu0 0
    %443 = vmatpush1.bf16.msra.mxu0 %v368
    %444 = vmatprep.subr.bf16.mxu0 0
    %445 = vmatpush1.bf16.msra.mxu0 %v369
    %446 = vmatprep.subr.bf16.mxu0 0
    %447 = vmatpush1.bf16.msra.mxu0 %v370
    %448 = vmatprep.subr.bf16.mxu0 0
    %449 = vmatpush1.bf16.msra.mxu0 %v371
    %450 = vmatprep.subr.bf16.mxu0 0
    %451 = vmatpush1.bf16.msra.mxu0 %v372
    %452 = vmatprep.subr.bf16.mxu0 0
    %453 = vmatpush1.bf16.msra.mxu0 %v373
    %454 = vmatprep.mubr.bf16.mxu0 %v163
    %455 = vmatmul.mubr.bf16.gmra.mrb[0].mxu0 %v162
    %v456 = vpop.f32.mrb[0].mxu0
    %v457 = vadd.f32 0.0, %v456
    %v458 = vpop.f32.mrb[0].mxu0
    %v459 = vpop.f32.mrb[0].mxu0
    %v460 = vpop.f32.mrb[0].mxu0
    %461 = vdwg.mxu0
    %462 = vmatprep.subr.bf16.mxu0 0
    %463 = vmatpush1.bf16.msra.mxu0 %v374
    %464 = vmatprep.subr.bf16.mxu0 0
    %465 = vmatpush1.bf16.msra.mxu0 %v375
    %466 = vmatprep.subr.bf16.mxu0 0
    %467 = vmatpush1.bf16.msra.mxu0 %v376
    %468 = vmatprep.subr.bf16.mxu0 0
    %469 = vmatpush1.bf16.msra.mxu0 %v377
    %470 = vmatprep.subr.bf16.mxu0 0
    %471 = vmatpush1.bf16.msra.mxu0 %v378
    %472 = vmatprep.subr.bf16.mxu0 0
    %473 = vmatpush1.bf16.msra.mxu0 %v379
    %474 = vmatprep.subr.bf16.mxu0 0
    %475 = vmatpush1.bf16.msra.mxu0 %v380
    %476 = vmatprep.subr.bf16.mxu0 0
    %477 = vmatpush1.bf16.msra.mxu0 %v381
    %478 = vmatprep.subr.bf16.mxu0 0
    %479 = vmatpush1.bf16.msra.mxu0 %v382
    %480 = vmatprep.subr.bf16.mxu0 0
    %481 = vmatpush1.bf16.msra.mxu0 %v383
    %482 = vmatprep.subr.bf16.mxu0 0
    %483 = vmatpush1.bf16.msra.mxu0 %v384
    %484 = vmatprep.subr.bf16.mxu0 0
    %485 = vmatpush1.bf16.msra.mxu0 %v385
    %486 = vmatprep.subr.bf16.mxu0 0
    %487 = vmatpush1.bf16.msra.mxu0 %v386
    %488 = vmatprep.subr.bf16.mxu0 0
    %489 = vmatpush1.bf16.msra.mxu0 %v387
    %490 = vmatprep.subr.bf16.mxu0 0
    %491 = vmatpush1.bf16.msra.mxu0 %v388
    %492 = vmatprep.subr.bf16.mxu0 0
    %493 = vmatpush1.bf16.msra.mxu0 %v389
    %494 = vmatprep.mubr.bf16.mxu0 %v165
    %495 = vmatmul.mubr.bf16.gmra.mrb[0].mxu0 %v164
    %v496 = vpop.f32.mrb[0].mxu0
    %v497 = vadd.f32 %v457, %v496
    %v498 = vpop.f32.mrb[0].mxu0
    %v499 = vpop.f32.mrb[0].mxu0
    %v500 = vpop.f32.mrb[0].mxu0
    %501 = vdwg.mxu0
    %502 = vst [vmem:[#allocation5] sm:$0xff] %v497
    // Predicated region
    $region22: #{tpu_custom_call.1} parent=1 // pred_check
      _
    $region23: #{tpu_custom_call.1} parent=1 // pred_check_branch
      %504 = sbr.rel (0) target = $region25
    $region24: #{tpu_custom_call.1} parent=1 // pred_region
      %s506 = ssub.s32 128, 128
      %507 = vsyncadd [#allocation4], %s506
      %s509 = sshll.u32 [#allocation5], 4
      %s510 = int_to_ptr.vmem [resolvable:$true] %s509
      %512 = dma.vmem_to_hbm [thread:$0]  %s510, 128, %s4, [#allocation4]
    $region25: #{tpu_custom_call.1} parent=1 // pred_fallthru
      _
    // Predicated region
    $region26: #{tpu_custom_call.1} parent=1 // pred_check
      _
    $region27: #{tpu_custom_call.1} parent=1 // pred_check_branch
      %514 = sbr.rel (0) target = $region29
    $region28: #{tpu_custom_call.1} parent=1 // pred_region
      %515 = dma.done [#allocation4], 128
    $region29: #{tpu_custom_call.1} parent=1 // pred_fallthru
      _
    %516 = vsyncpa [#allocation3], 1
    %517 = vsyncpa [#allocation4], 1

</llo_original>
